<compile_context>
chip_gen: v7x
topology: tpu7x:2x2x1
jax: 0.10.0
libtpu: 0.0.40
codegen_flags: <defaults>
</compile_context>

<pallas_src>
import functools

import jax
import jax.numpy as jnp
from jax.experimental import pallas as pl
from jax.experimental.pallas import tpu as pltpu

LANE = 128
SUBLANE = 8
TR_MAX = 1024  # max sublane rows per block: 4*1024*128*4B = 2 MiB per input block


def _round_up(x, m):
    return ((x + m - 1) // m) * m


def _cdiv(a, b):
    return -(-a // b)


def _compute_loss_tile(pred_ref, target_ref, loss_type):
    """pred_ref/target_ref: (4, TR, 128) refs; returns (TR, 128) f32 loss."""
    px, py, pw, ph = pred_ref[0], pred_ref[1], pred_ref[2], pred_ref[3]
    tx, ty, tw, th = target_ref[0], target_ref[1], target_ref[2], target_ref[3]

    # hoisted half-extents, reused by both the IoU and GIoU branches
    hpw, hph = pw * 0.5, ph * 0.5
    htw, hth = tw * 0.5, th * 0.5
    p_x1, p_x2 = px - hpw, px + hpw
    p_y1, p_y2 = py - hph, py + hph
    t_x1, t_x2 = tx - htw, tx + htw
    t_y1, t_y2 = ty - hth, ty + hth

    # intersection box
    tl_x, tl_y = jnp.maximum(p_x1, t_x1), jnp.maximum(p_y1, t_y1)
    br_x, br_y = jnp.minimum(p_x2, t_x2), jnp.minimum(p_y2, t_y2)

    area_p = pw * ph
    area_g = tw * th
    overlap = jnp.logical_and(tl_x < br_x, tl_y < br_y)
    area_i = jnp.where(overlap, (br_x - tl_x) * (br_y - tl_y), 0.0)
    area_u = area_p + area_g - area_i
    iou = area_i / (area_u + 1e-16)

    if loss_type == "iou":
        return 1.0 - iou * iou
    elif loss_type == "giou":
        # enclosing box (reuses the corner extents computed above)
        c_tl_x, c_tl_y = jnp.minimum(p_x1, t_x1), jnp.minimum(p_y1, t_y1)
        c_br_x, c_br_y = jnp.maximum(p_x2, t_x2), jnp.maximum(p_y2, t_y2)
        area_c = (c_br_x - c_tl_x) * (c_br_y - c_tl_y)
        giou = iou - (area_c - area_u) / jnp.maximum(area_c, 1e-16)
        return 1.0 - jnp.clip(giou, -1.0, 1.0)
    else:
        raise ValueError(f"unknown loss_type {loss_type}")


def _iou_loss_kernel(pred_ref, target_ref, loss_ref, *, loss_type):
    # reduction='none': write the dense (TR, 128) loss tile
    loss_ref[...] = _compute_loss_tile(pred_ref, target_ref, loss_type)


def _iou_loss_reduce_kernel(pred_ref, target_ref, out_ref, acc_ref, *,
                            loss_type, scale):
    # fused reduction: padded boxes are identical unit boxes -> loss == 0,
    # so no masking is needed anywhere in the kernel.
    pid = pl.program_id(0)

    @pl.when(pid == 0)
    def _init():
        acc_ref[...] = jnp.zeros_like(acc_ref)

    loss = _compute_loss_tile(pred_ref, target_ref, loss_type)  # (tr, 128)
    acc_ref[...] += jnp.sum(loss, axis=0, keepdims=True)        # (1, 128)

    @pl.when(pid == pl.num_programs(0) - 1)
    def _finalize():
        # lane reduction + optional 1/N scaling ('mean') fused here
        out_ref[...] = jnp.sum(acc_ref[...], axis=1, keepdims=True) * scale


def _to_slab(x, n, n_pad, rows_pad):
    """(n, 4) boxes -> (4, rows_pad, 128) lane/sublane-dense slab.

    Padded rows are identical unit boxes (cx=cy=0, w=h=1) so their loss is
    exactly 0 for both 'iou' and 'giou' (no in-kernel masking required).
    Single fused pad + transpose + reshape; one extra HBM pass, unavoidable
    given the (N, 4) input convention.
    """
    pad = n_pad - n
    if pad:
        pad_rows = jnp.broadcast_to(
            jnp.array([0.0, 0.0, 1.0, 1.0], jnp.float32), (pad, 4))
        x = jnp.concatenate([x, pad_rows], axis=0)
    return x.T.reshape(4, rows_pad, LANE)


def iou_loss(pred, target, *, reduction="none", loss_type="iou"):
    """JAX/Pallas equivalent of YOLOX IOUloss.forward."""
    assert pred.shape[0] == target.shape[0]
    if loss_type not in ("iou", "giou"):
        raise ValueError(f"unknown loss_type {loss_type}")
    if reduction not in ("none", "sum", "mean"):
        raise ValueError(f"unknown reduction {reduction}")

    pred = jnp.asarray(pred, jnp.float32).reshape(-1, 4)
    target = jnp.asarray(target, jnp.float32).reshape(-1, 4)
    n = pred.shape[0]

    # Tiling: boxes laid out as (4, rows_pad, 128); each block is (4, tr, 128)
    # with tr a multiple of 8, balanced across blocks to limit pad waste.
    rows = max(1, _cdiv(n, LANE))
    num_blocks = _cdiv(rows, TR_MAX)
    tr = _round_up(_cdiv(rows, num_blocks), SUBLANE)
    rows_pad = num_blocks * tr
    n_pad = rows_pad * LANE

    pred_t = _to_slab(pred, n, n_pad, rows_pad)
    target_t = _to_slab(target, n, n_pad, rows_pad)

    in_specs = [
        pl.BlockSpec((4, tr, LANE), lambda i: (0, i, 0)),
        pl.BlockSpec((4, tr, LANE), lambda i: (0, i, 0)),
    ]

    if reduction == "none":
        out = pl.pallas_call(
            functools.partial(_iou_loss_kernel, loss_type=loss_type),
            out_shape=jax.ShapeDtypeStruct((rows_pad, LANE), jnp.float32),
            grid_spec=pltpu.PrefetchScalarGridSpec(
                num_scalar_prefetch=0,
                grid=(num_blocks,),
                in_specs=in_specs,
                out_specs=pl.BlockSpec((tr, LANE), lambda i: (i, 0)),
            ),
            compiler_params=pltpu.CompilerParams(
                dimension_semantics=("parallel",)),
        )(pred_t, target_t)
        return out.reshape(-1)[:n]  # per-box loss, reduction='none'

    # reduction == 'sum' or 'mean': fused in-kernel reduction -> (1,1) scalar
    scale = 1.0 / float(n) if (reduction == "mean" and n > 0) else 1.0
    total = pl.pallas_call(
        functools.partial(_iou_loss_reduce_kernel,
                          loss_type=loss_type, scale=scale),
        out_shape=jax.ShapeDtypeStruct((1, 1), jnp.float32),
        grid_spec=pltpu.PrefetchScalarGridSpec(
            num_scalar_prefetch=0,
            grid=(num_blocks,),
            in_specs=in_specs,
            out_specs=pl.BlockSpec((1, 1), lambda i: (0, 0)),
            scratch_shapes=[pltpu.VMEM((1, LANE), jnp.float32)],
        ),
        compiler_params=pltpu.CompilerParams(
            dimension_semantics=("arbitrary",)),  # accumulator across grid
    )(pred_t, target_t)

    result = total[0, 0]
    if reduction == "mean" and n == 0:
        result = result / jnp.float32(n)  # nan, matching mean of empty tensor
    return result


def _reference_iou_loss(pred, target, reduction="none", loss_type="iou"):
    # pure-JAX reference mirroring the PyTorch module
    pred = pred.reshape(-1, 4).astype(jnp.float32)
    target = target.reshape(-1, 4).astype(jnp.float32)
    tl = jnp.maximum(pred[:, :2] - pred[:, 2:] / 2, target[:, :2] - target[:, 2:] / 2)
    br = jnp.minimum(pred[:, :2] + pred[:, 2:] / 2, target[:, :2] + target[:, 2:] / 2)
    area_p = jnp.prod(pred[:, 2:], axis=1)
    area_g = jnp.prod(target[:, 2:], axis=1)
    en = jnp.prod((tl < br).astype(jnp.float32), axis=1)
    area_i = jnp.prod(br - tl, axis=1) * en
    area_u = area_p + area_g - area_i
    iou = area_i / (area_u + 1e-16)
    if loss_type == "iou":
        loss = 1 - iou ** 2
    else:
        c_tl = jnp.minimum(pred[:, :2] - pred[:, 2:] / 2, target[:, :2] - target[:, 2:] / 2)
        c_br = jnp.maximum(pred[:, :2] + pred[:, 2:] / 2, target[:, :2] + target[:, 2:] / 2)
        area_c = jnp.prod(c_br - c_tl, axis=1)
        giou = iou - (area_c - area_u) / jnp.maximum(area_c, 1e-16)
        loss = 1 - jnp.clip(giou, -1.0, 1.0)
    if reduction == "mean":
        loss = loss.mean()
    elif reduction == "sum":
        loss = loss.sum()
    return loss


if __name__ == "__main__":
    key = jax.random.PRNGKey(0)
    k1, k2, k3, k4 = jax.random.split(key, 4)

    N = 200  # number of boxes (spans >1 sublane row, exercises tail padding)
    # boxes in (cx, cy, w, h); widths/heights strictly positive
    pred = jnp.concatenate(
        [jax.random.uniform(k1, (N, 2)) * 10.0,
         jax.random.uniform(k2, (N, 2)) * 4.0 + 0.5], axis=1
    ).astype(jnp.float32)
    target = jnp.concatenate(
        [jax.random.uniform(k3, (N, 2)) * 10.0,
         jax.random.uniform(k4, (N, 2)) * 4.0 + 0.5], axis=1
    ).astype(jnp.float32)

    # default module config: reduction='none', loss_type='iou'
    out = jax.block_until_ready(iou_loss(pred, target, reduction="none", loss_type="iou"))
    ref = _reference_iou_loss(pred, target, reduction="none", loss_type="iou")
    assert out.shape == (N,)
    assert jnp.allclose(out, ref, atol=1e-5, rtol=1e-5)

    # giou branch, reduction='none'
    out_g = jax.block_until_ready(iou_loss(pred, target, reduction="none", loss_type="giou"))
    ref_g = _reference_iou_loss(pred, target, reduction="none", loss_type="giou")
    assert jnp.allclose(out_g, ref_g, atol=1e-5, rtol=1e-5)

    # giou branch + fused sum reduction
    out_giou = jax.block_until_ready(
        iou_loss(pred, target, reduction="sum", loss_type="giou"))
    ref_giou = _reference_iou_loss(pred, target, reduction="sum", loss_type="giou")
    assert jnp.allclose(out_giou, ref_giou, atol=1e-4, rtol=1e-5)

    # fused mean reduction on the iou branch
    out_mean = jax.block_until_ready(
        iou_loss(pred, target, reduction="mean", loss_type="iou"))
    ref_mean = _reference_iou_loss(pred, target, reduction="mean", loss_type="iou")
    assert jnp.allclose(out_mean, ref_mean, atol=1e-5, rtol=1e-5)

    print("KERNEL_OK")
</pallas_src>

<mosaic_0001>
module attributes {stable_mosaic.version = 11 : i64} {
  func.func @_iou_loss_kernel(%arg0: i32, %arg1: memref<4x8x128xf32, #tpu.memory_space<vmem>>, %arg2: memref<4x8x128xf32, #tpu.memory_space<vmem>>, %arg3: memref<8x128xf32, #tpu.memory_space<vmem>>) attributes {dimension_semantics = [#tpu.dimension_semantics<parallel>], iteration_bounds = array<i64: 1>, scalar_prefetch = 0 : i64, scratch_operands = 0 : i64, tpu.core_type = #tpu.core_type<tc>, window_params = [{transform_indices = @transform_0, window_bounds = array<i64: 4, 8, 128>}, {transform_indices = @transform_1, window_bounds = array<i64: 4, 8, 128>}, {transform_indices = @transform_2, window_bounds = array<i64: 8, 128>}]} {
    %c0 = arith.constant 0 : index
    %c0_0 = arith.constant 0 : index
    %c0_1 = arith.constant 0 : index
    %0 = vector.load %arg1[%c0, %c0_0, %c0_1] : memref<4x8x128xf32, #tpu.memory_space<vmem>>, vector<1x8x128xf32>
    %1 = vector.shape_cast %0 : vector<1x8x128xf32> to vector<8x128xf32>
    %c1 = arith.constant 1 : index
    %c0_2 = arith.constant 0 : index
    %c0_3 = arith.constant 0 : index
    %2 = vector.load %arg1[%c1, %c0_2, %c0_3] : memref<4x8x128xf32, #tpu.memory_space<vmem>>, vector<1x8x128xf32>
    %3 = vector.shape_cast %2 : vector<1x8x128xf32> to vector<8x128xf32>
    %c2 = arith.constant 2 : index
    %c0_4 = arith.constant 0 : index
    %c0_5 = arith.constant 0 : index
    %4 = vector.load %arg1[%c2, %c0_4, %c0_5] : memref<4x8x128xf32, #tpu.memory_space<vmem>>, vector<1x8x128xf32>
    %5 = vector.shape_cast %4 : vector<1x8x128xf32> to vector<8x128xf32>
    %c3 = arith.constant 3 : index
    %c0_6 = arith.constant 0 : index
    %c0_7 = arith.constant 0 : index
    %6 = vector.load %arg1[%c3, %c0_6, %c0_7] : memref<4x8x128xf32, #tpu.memory_space<vmem>>, vector<1x8x128xf32>
    %7 = vector.shape_cast %6 : vector<1x8x128xf32> to vector<8x128xf32>
    %c0_8 = arith.constant 0 : index
    %c0_9 = arith.constant 0 : index
    %c0_10 = arith.constant 0 : index
    %8 = vector.load %arg2[%c0_8, %c0_9, %c0_10] : memref<4x8x128xf32, #tpu.memory_space<vmem>>, vector<1x8x128xf32>
    %9 = vector.shape_cast %8 : vector<1x8x128xf32> to vector<8x128xf32>
    %c1_11 = arith.constant 1 : index
    %c0_12 = arith.constant 0 : index
    %c0_13 = arith.constant 0 : index
    %10 = vector.load %arg2[%c1_11, %c0_12, %c0_13] : memref<4x8x128xf32, #tpu.memory_space<vmem>>, vector<1x8x128xf32>
    %11 = vector.shape_cast %10 : vector<1x8x128xf32> to vector<8x128xf32>
    %c2_14 = arith.constant 2 : index
    %c0_15 = arith.constant 0 : index
    %c0_16 = arith.constant 0 : index
    %12 = vector.load %arg2[%c2_14, %c0_15, %c0_16] : memref<4x8x128xf32, #tpu.memory_space<vmem>>, vector<1x8x128xf32>
    %13 = vector.shape_cast %12 : vector<1x8x128xf32> to vector<8x128xf32>
    %c3_17 = arith.constant 3 : index
    %c0_18 = arith.constant 0 : index
    %c0_19 = arith.constant 0 : index
    %14 = vector.load %arg2[%c3_17, %c0_18, %c0_19] : memref<4x8x128xf32, #tpu.memory_space<vmem>>, vector<1x8x128xf32>
    %15 = vector.shape_cast %14 : vector<1x8x128xf32> to vector<8x128xf32>
    %cst = arith.constant 5.000000e-01 : f32
    %16 = vector.broadcast %cst : f32 to vector<8x128xf32>
    %17 = arith.mulf %5, %16 : vector<8x128xf32>
    %cst_20 = arith.constant 5.000000e-01 : f32
    %18 = vector.broadcast %cst_20 : f32 to vector<8x128xf32>
    %19 = arith.mulf %7, %18 : vector<8x128xf32>
    %cst_21 = arith.constant 5.000000e-01 : f32
    %20 = vector.broadcast %cst_21 : f32 to vector<8x128xf32>
    %21 = arith.mulf %13, %20 : vector<8x128xf32>
    %cst_22 = arith.constant 5.000000e-01 : f32
    %22 = vector.broadcast %cst_22 : f32 to vector<8x128xf32>
    %23 = arith.mulf %15, %22 : vector<8x128xf32>
    %24 = arith.subf %1, %17 : vector<8x128xf32>
    %25 = arith.addf %1, %17 : vector<8x128xf32>
    %26 = arith.subf %3, %19 : vector<8x128xf32>
    %27 = arith.addf %3, %19 : vector<8x128xf32>
    %28 = arith.subf %9, %21 : vector<8x128xf32>
    %29 = arith.addf %9, %21 : vector<8x128xf32>
    %30 = arith.subf %11, %23 : vector<8x128xf32>
    %31 = arith.addf %11, %23 : vector<8x128xf32>
    %32 = arith.maximumf %24, %28 : vector<8x128xf32>
    %33 = arith.maximumf %26, %30 : vector<8x128xf32>
    %34 = arith.minimumf %25, %29 : vector<8x128xf32>
    %35 = arith.minimumf %27, %31 : vector<8x128xf32>
    %36 = arith.mulf %5, %7 : vector<8x128xf32>
    %37 = arith.mulf %13, %15 : vector<8x128xf32>
    %38 = arith.cmpf olt, %32, %34 : vector<8x128xf32>
    %39 = arith.cmpf olt, %33, %35 : vector<8x128xf32>
    %40 = arith.andi %38, %39 : vector<8x128xi1>
    %41 = arith.subf %34, %32 : vector<8x128xf32>
    %42 = arith.subf %35, %33 : vector<8x128xf32>
    %43 = arith.mulf %41, %42 : vector<8x128xf32>
    %cst_23 = arith.constant 0.000000e+00 : f32
    %44 = vector.broadcast %cst_23 : f32 to vector<8x128xf32>
    %45 = arith.select %40, %43, %44 : vector<8x128xi1>, vector<8x128xf32>
    %46 = arith.addf %36, %37 : vector<8x128xf32>
    %47 = arith.subf %46, %45 : vector<8x128xf32>
    %cst_24 = arith.constant 1.000000e-16 : f32
    %48 = vector.broadcast %cst_24 : f32 to vector<8x128xf32>
    %49 = arith.addf %47, %48 : vector<8x128xf32>
    %50 = arith.divf %45, %49 : vector<8x128xf32>
    %51 = arith.mulf %50, %50 : vector<8x128xf32>
    %cst_25 = arith.constant 1.000000e+00 : f32
    %52 = vector.broadcast %cst_25 : f32 to vector<8x128xf32>
    %53 = arith.subf %52, %51 : vector<8x128xf32>
    %c0_26 = arith.constant 0 : index
    %c0_27 = arith.constant 0 : index
    %54 = vector.load %arg3[%c0_26, %c0_27] : memref<8x128xf32, #tpu.memory_space<vmem>>, vector<8x128xf32>
    tpu.vector_store %arg3[%c0_26, %c0_27], %53 {strides = array<i32>} : memref<8x128xf32, #tpu.memory_space<vmem>>, vector<8x128xf32>,
    return
  }
  func.func @transform_0(%arg0: i32) -> (i32, i32, i32) {
    %c0_i32 = arith.constant 0 : i32
    %c0_i32_0 = arith.constant 0 : i32
    %c0_i32_1 = arith.constant 0 : i32
    return %c0_i32, %arg0, %c0_i32_0 : i32, i32, i32
  }
  func.func @transform_1(%arg0: i32) -> (i32, i32, i32) {
    %c0_i32 = arith.constant 0 : i32
    %c0_i32_0 = arith.constant 0 : i32
    %c0_i32_1 = arith.constant 0 : i32
    return %c0_i32, %arg0, %c0_i32_0 : i32, i32, i32
  }
  func.func @transform_2(%arg0: i32) -> (i32, i32) {
    %c0_i32 = arith.constant 0 : i32
    %c0_i32_0 = arith.constant 0 : i32
    return %arg0, %c0_i32 : i32, i32
  }
}

</mosaic_0001>

<llo_original>
// kernel: tpu_custom_call.1
$region0: #{tpu_custom_call.1}
  #allocation0 [shape = 'u32[]', space=smem, size = 0x4, offset = 0x4, fixed_abs, tag = 'smem constant byte address 0x4 - core index']
  #allocation1 [shape = 'u32[144,128]{1,0:T(1,128)}', space=vmem, size = 0x12000, scoped, tag = 'internal scratch']
  %s0 = inlined_call_operand.hbm [shape: f32[4,8,128], index: 0, kind: input, shape index: {}]
  %s1 = inlined_call_operand.hbm [shape: f32[4,8,128], index: 1, kind: input, shape index: {}]
  %s2 = inlined_call_operand.hbm [shape: f32[8,128], index: 2, kind: output, shape index: {}]
  %s3 = sld [smem:[#allocation0]]
  $region26: #{tpu_custom_call.1} parent=0
    _
  %s5 = ssub.s32 1, %s3
  %s6 = scalar_select 0, %s5, %s3
  $region1: #{tpu_custom_call.1} parent=0
    #allocation2 [shape = 'u8[16384]{0}', space=vmem, size = 0x4000, scoped, tag = 'input window, operand 0, single buffered']
    #allocation3 [shape = 's32[1]{0}', space=sflag, size = 0x4, scoped, tag = 'scoped memory for tpu_custom_call.1']
    #allocation4 [shape = 's32[1]{0}', space=sflag, size = 0x4, scoped, tag = 'scoped memory for tpu_custom_call.1']
    #allocation5 [shape = 'u8[16384]{0}', space=vmem, size = 0x4000, scoped, tag = 'input window, operand 1, single buffered']
    #allocation6 [shape = 's32[1]{0}', space=sflag, size = 0x4, scoped, tag = 'scoped memory for tpu_custom_call.1']
    #allocation7 [shape = 'u8[4096]{0}', space=vmem, size = 0x1000, scoped, tag = 'output window, operand 0, single buffered']
    %7 = vsyncpa [#allocation3], 0
    %8 = vsyncpa [#allocation6], 0
    %9 = vsyncpa [#allocation4], 0
    // Predicated region
    $region2: #{tpu_custom_call.1} parent=1 // pred_check
      _
    $region3: #{tpu_custom_call.1} parent=1 // pred_check_branch
      %11 = sbr.rel (0) target = $region5
    $region4: #{tpu_custom_call.1} parent=1 // pred_region
      %s13 = ssub.s32 512, 512
      %14 = vsyncadd [#allocation3], %s13
      %s15 = sshll.u32 [#allocation2], 4
      %s16 = int_to_ptr.vmem [resolvable:$true] %s15
      %21 = dma.hbm_to_vmem [thread:$0]  %s0, 512, %s16, [#allocation3], 128, 128, 8
    $region5: #{tpu_custom_call.1} parent=1 // pred_fallthru
      _
    // Predicated region
    $region6: #{tpu_custom_call.1} parent=1 // pred_check
      _
    $region7: #{tpu_custom_call.1} parent=1 // pred_check_branch
      %23 = sbr.rel (0) target = $region9
    $region8: #{tpu_custom_call.1} parent=1 // pred_region
      %s25 = ssub.s32 512, 512
      %26 = vsyncadd [#allocation6], %s25
      %s27 = sshll.u32 [#allocation5], 4
      %s28 = int_to_ptr.vmem [resolvable:$true] %s27
      %33 = dma.hbm_to_vmem [thread:$0]  %s1, 512, %s28, [#allocation6], 128, 128, 8
    $region9: #{tpu_custom_call.1} parent=1 // pred_fallthru
      _
    // Predicated region
    $region10: #{tpu_custom_call.1} parent=1 // pred_check
      _
    $region11: #{tpu_custom_call.1} parent=1 // pred_check_branch
      %35 = sbr.rel (0) target = $region13
    $region12: #{tpu_custom_call.1} parent=1 // pred_region
      %36 = dma.done [#allocation3], 512
    $region13: #{tpu_custom_call.1} parent=1 // pred_fallthru
      _
    // Predicated region
    $region14: #{tpu_custom_call.1} parent=1 // pred_check
      _
    $region15: #{tpu_custom_call.1} parent=1 // pred_check_branch
      %38 = sbr.rel (0) target = $region17
    $region16: #{tpu_custom_call.1} parent=1 // pred_region
      %39 = dma.done [#allocation6], 512
    $region17: #{tpu_custom_call.1} parent=1 // pred_fallthru
      _
    %v40 = vld [vmem:[#allocation2] sm:$0xff]
    %s41 = scalar_lea.vmem [#allocation2], 8
    %v42 = vld [vmem:[%s41] sm:$0xff]
    %s43 = scalar_lea.vmem [#allocation2], 16
    %v44 = vld [vmem:[%s43] sm:$0xff]
    %s45 = scalar_lea.vmem [#allocation2], 24
    %v46 = vld [vmem:[%s45] sm:$0xff]
    %v47 = vld [vmem:[#allocation5] sm:$0xff]
    %s48 = scalar_lea.vmem [#allocation5], 8
    %v49 = vld [vmem:[%s48] sm:$0xff]
    %s50 = scalar_lea.vmem [#allocation5], 16
    %v51 = vld [vmem:[%s50] sm:$0xff]
    %s52 = scalar_lea.vmem [#allocation5], 24
    %v53 = vld [vmem:[%s52] sm:$0xff]
    %v54 = vmul.f32 %v44, 0.5
    %v55 = vmul.f32 %v46, 0.5
    %v56 = vmul.f32 %v51, 0.5
    %v57 = vmul.f32 %v53, 0.5
    %v58 = vsub.f32 %v40, %v54
    %v59 = vadd.f32 %v40, %v54
    %v60 = vsub.f32 %v42, %v55
    %v61 = vadd.f32 %v42, %v55
    %v62 = vsub.f32 %v47, %v56
    %v63 = vadd.f32 %v47, %v56
    %v64 = vsub.f32 %v49, %v57
    %v65 = vadd.f32 %v49, %v57
    %v66 = vmax.f32 %v58, %v62
    %v67 = vmax.f32 %v60, %v64
    %v68 = vmin.f32 %v59, %v63
    %v69 = vmin.f32 %v61, %v65
    %v70 = vmul.f32 %v44, %v46
    %v71 = vmul.f32 %v51, %v53
    %vm72 = vcmp.lt.f32.partialorder %v66, %v68
    %vm73 = vcmp.lt.f32.partialorder %v67, %v69
    %vm74 = vmand %vm72, %vm73
    %v75 = vsub.f32 %v68, %v66
    %v76 = vsub.f32 %v69, %v67
    %v77 = vmul.f32 %v75, %v76
    %v78 = vsel %vm74, %v77, 0.0
    %v79 = vadd.f32 %v70, %v71
    %v80 = vsub.f32 %v79, %v78
    %v81 = vadd.f32 %v80, 1e-16
    %v82 = vrcp.pop %v81
    %v83 = vmul.f32 %v78, %v82
    %v84 = vmul.f32 %v83, %v83
    %v85 = vsub.f32 1.0, %v84
    %86 = vst [vmem:[#allocation7] sm:$0xff] %v85
    // Predicated region
    $region18: #{tpu_custom_call.1} parent=1 // pred_check
      _
    $region19: #{tpu_custom_call.1} parent=1 // pred_check_branch
      %88 = sbr.rel (0) target = $region21
    $region20: #{tpu_custom_call.1} parent=1 // pred_region
      %s90 = ssub.s32 128, 128
      %91 = vsyncadd [#allocation4], %s90
      %s93 = sshll.u32 [#allocation7], 4
      %s94 = int_to_ptr.vmem [resolvable:$true] %s93
      %96 = dma.vmem_to_hbm [thread:$0]  %s94, 128, %s2, [#allocation4]
    $region21: #{tpu_custom_call.1} parent=1 // pred_fallthru
      _
    // Predicated region
    $region22: #{tpu_custom_call.1} parent=1 // pred_check
      _
    $region23: #{tpu_custom_call.1} parent=1 // pred_check_branch
      %98 = sbr.rel (0) target = $region25
    $region24: #{tpu_custom_call.1} parent=1 // pred_region
      %99 = dma.done [#allocation4], 128
    $region25: #{tpu_custom_call.1} parent=1 // pred_fallthru
      _
    %100 = vsyncpa [#allocation3], 1
    %101 = vsyncpa [#allocation6], 1
    %102 = vsyncpa [#allocation4], 1

</llo_original>
